<compile_context>
chip_gen: v7x
topology: tpu7x:2x2x1
jax: 0.10.0
libtpu: 0.0.40
codegen_flags: <defaults>
</compile_context>

<pallas_src>
from functools import partial

import jax
import jax.numpy as jnp
from jax.experimental import pallas as pl
from jax.experimental.pallas import tpu as pltpu


def attention_kernel(x_ref, wq_ref, wk_ref, wv_ref, wo_ref, bo_ref, o_ref, *, scale):
    """One (batch b, head h) grid step.

    x_ref : (1, N, D)     input tokens for batch b
    wq/wk/wv_ref : (1, D, dh)   per-head projection weights
    wo_ref: (1, dh, Do)   per-head slice of the output projection
    bo_ref: (1, Do)       output-projection bias
    o_ref : (1, N, Do)    output block for batch b (resident across the head axis)
    """
    h = pl.program_id(1)

    x = x_ref[0]                                                       # (N, D)
    q = jnp.dot(x, wq_ref[0], preferred_element_type=jnp.float32)      # (N, dh)
    k = jnp.dot(x, wk_ref[0], preferred_element_type=jnp.float32)      # (N, dh)
    v = jnp.dot(x, wv_ref[0], preferred_element_type=jnp.float32)      # (N, dh)

    # q @ k^T without materializing a transpose: contract the dh axes.
    dots = jax.lax.dot_general(q, k, (((1,), (1,)), ((), ())),
                               preferred_element_type=jnp.float32)     # (N, N)
    dots = dots * scale
    dots = dots - jnp.max(dots, axis=-1, keepdims=True)
    e = jnp.exp(dots)
    attn = e / jnp.sum(e, axis=-1, keepdims=True)
    # TODO(synk): attention dropout omitted (eval mode / p=0.0).

    ctx = jnp.dot(attn, v, preferred_element_type=jnp.float32)         # (N, dh)
    contrib = jnp.dot(ctx, wo_ref[0], preferred_element_type=jnp.float32)  # (N, Do)

    # Initialize the resident output block with the output-projection bias on
    # the first head, then accumulate each head's contribution.
    @pl.when(h == 0)
    def _():
        o_ref[0] = jnp.broadcast_to(bo_ref[...], o_ref.shape[1:])

    o_ref[0] += contrib


def attention_forward(x, w_qkv, w_out, b_out, *, heads, dim_head):
    """x: (B, N, dim). w_qkv: (3*heads*dim_head, dim)  (PyTorch Linear layout,
    bias=False). w_out: (dim, heads*dim_head), b_out: (dim,)."""
    B, N, D = x.shape
    inner = heads * dim_head
    assert w_qkv.shape == (3 * inner, D)
    scale = float(dim_head) ** -0.5
    project_out = not (heads == 1 and dim_head == D)

    # PyTorch Linear: y = x @ W^T. Split QKV and reshape to per-head (H, D, dh).
    wq, wk, wv = jnp.split(w_qkv.astype(jnp.float32), 3, axis=0)       # (inner, D) each
    def to_h_d_dh(w):
        return jnp.transpose(w.reshape(heads, dim_head, D), (0, 2, 1))  # (H, D, dh)
    wq_h, wk_h, wv_h = to_h_d_dh(wq), to_h_d_dh(wk), to_h_d_dh(wv)

    if project_out:
        # (Do, H*dh) -> (H, dh, Do)
        wo_h = jnp.transpose(w_out.astype(jnp.float32).reshape(D, heads, dim_head),
                             (1, 2, 0))
        bo = b_out.reshape(1, D).astype(jnp.float32)
        d_out = D
    else:
        # to_out == nn.Identity(): heads == 1 and dim_head == dim.
        wo_h = jnp.eye(dim_head, dtype=jnp.float32)[None]               # (1, dh, dh)
        bo = jnp.zeros((1, dim_head), jnp.float32)
        d_out = dim_head

    flops = 2 * B * heads * N * (3 * D * dim_head          # qkv projections
                                 + 2 * N * dim_head        # qk^T and attn @ v
                                 + dim_head * d_out)       # output projection
    bytes_accessed = 4 * (heads * x.size                    # x re-read per head
                          + 3 * inner * D + inner * d_out + d_out
                          + B * N * d_out)

    out = pl.pallas_call(
        partial(attention_kernel, scale=scale),
        out_shape=jax.ShapeDtypeStruct((B, N, d_out), jnp.float32),
        grid_spec=pltpu.PrefetchScalarGridSpec(
            num_scalar_prefetch=0,
            grid=(B, heads),
            in_specs=[
                pl.BlockSpec((1, N, D), lambda b, h: (b, 0, 0)),
                pl.BlockSpec((1, D, dim_head), lambda b, h: (h, 0, 0)),
                pl.BlockSpec((1, D, dim_head), lambda b, h: (h, 0, 0)),
                pl.BlockSpec((1, D, dim_head), lambda b, h: (h, 0, 0)),
                pl.BlockSpec((1, dim_head, d_out), lambda b, h: (h, 0, 0)),
                pl.BlockSpec((1, d_out), lambda b, h: (0, 0)),
            ],
            out_specs=pl.BlockSpec((1, N, d_out), lambda b, h: (b, 0, 0)),
        ),
        compiler_params=pltpu.CompilerParams(
            dimension_semantics=("parallel", "arbitrary")),
        cost_estimate=pl.CostEstimate(
            flops=flops,
            transcendentals=B * heads * N * N,
            bytes_accessed=bytes_accessed),
    )(x.astype(jnp.float32), wq_h, wk_h, wv_h, wo_h, bo)
    return out


def attention_reference(x, w_qkv, w_out, b_out, *, heads, dim_head):
    """Pure-JAX reference of the PyTorch Attention forward (eval mode)."""
    B, N, D = x.shape
    inner = heads * dim_head
    qkv = x @ w_qkv.T                                     # (B, N, 3*inner)
    q, k, v = jnp.split(qkv, 3, axis=-1)
    split = lambda t: jnp.transpose(t.reshape(B, N, heads, dim_head), (0, 2, 1, 3))
    q, k, v = split(q), split(k), split(v)
    dots = jnp.einsum('bhnd,bhmd->bhnm', q, k) * (float(dim_head) ** -0.5)
    attn = jax.nn.softmax(dots, axis=-1)
    ctx = jnp.einsum('bhnm,bhmd->bhnd', attn, v)
    ctx = jnp.transpose(ctx, (0, 2, 1, 3)).reshape(B, N, inner)
    if not (heads == 1 and dim_head == D):
        return ctx @ w_out.T + b_out
    return ctx


if __name__ == "__main__":
    key = jax.random.PRNGKey(0)
    kx, kqkv, kwo, kbo = jax.random.split(key, 4)

    # Small but lane-dense shapes: dim = 128 (one full lane register),
    # heads = 4, dim_head = 64, seq = 16, batch = 2.
    B, N, dim = 2, 16, 128
    heads, dim_head = 4, 64
    inner = heads * dim_head

    x = jax.random.normal(kx, (B, N, dim), jnp.float32)
    w_qkv = 0.05 * jax.random.normal(kqkv, (3 * inner, dim), jnp.float32)
    w_out = 0.05 * jax.random.normal(kwo, (dim, inner), jnp.float32)
    b_out = 0.05 * jax.random.normal(kbo, (dim,), jnp.float32)

    out = attention_forward(x, w_qkv, w_out, b_out, heads=heads, dim_head=dim_head)
    out = jax.block_until_ready(out)

    ref = attention_reference(x, w_qkv, w_out, b_out, heads=heads, dim_head=dim_head)
    ref = jax.block_until_ready(ref)

    assert out.shape == (B, N, dim)
    assert jnp.allclose(out, ref, atol=1e-4, rtol=1e-4), (
        f"max abs diff {jnp.max(jnp.abs(out - ref))}")

    print("KERNEL_OK")
</pallas_src>

<mosaic_0001>
module attributes {stable_mosaic.version = 11 : i64} {
  func.func @attention_kernel(%arg0: i32, %arg1: i32, %arg2: memref<1x16x128xf32, #tpu.memory_space<vmem>>, %arg3: memref<1x128x64xf32, #tpu.memory_space<vmem>>, %arg4: memref<1x128x64xf32, #tpu.memory_space<vmem>>, %arg5: memref<1x128x64xf32, #tpu.memory_space<vmem>>, %arg6: memref<1x64x128xf32, #tpu.memory_space<vmem>>, %arg7: memref<1x128xf32, #tpu.memory_space<vmem>>, %arg8: memref<1x16x128xf32, #tpu.memory_space<vmem>>) attributes {dimension_semantics = [#tpu.dimension_semantics<parallel>, #tpu.dimension_semantics<arbitrary>], iteration_bounds = array<i64: 2, 4>, scalar_prefetch = 0 : i64, scratch_operands = 0 : i64, tpu.core_type = #tpu.core_type<tc>, window_params = [{transform_indices = @transform_0, window_bounds = array<i64: 1, 16, 128>}, {transform_indices = @transform_1, window_bounds = array<i64: 1, 128, 64>}, {transform_indices = @transform_2, window_bounds = array<i64: 1, 128, 64>}, {transform_indices = @transform_3, window_bounds = array<i64: 1, 128, 64>}, {transform_indices = @transform_4, window_bounds = array<i64: 1, 64, 128>}, {pipeline_mode = #tpu.pipeline_mode<synchronous>, transform_indices = @transform_5, window_bounds = array<i64: 1, 128>}, {transform_indices = @transform_6, window_bounds = array<i64: 1, 16, 128>}]} {
    %c0 = arith.constant 0 : index
    %c0_0 = arith.constant 0 : index
    %c0_1 = arith.constant 0 : index
    %0 = vector.load %arg2[%c0, %c0_0, %c0_1] : memref<1x16x128xf32, #tpu.memory_space<vmem>>, vector<1x16x128xf32>
    %1 = vector.shape_cast %0 : vector<1x16x128xf32> to vector<16x128xf32>
    %c0_2 = arith.constant 0 : index
    %c0_3 = arith.constant 0 : index
    %c0_4 = arith.constant 0 : index
    %2 = vector.load %arg3[%c0_2, %c0_3, %c0_4] : memref<1x128x64xf32, #tpu.memory_space<vmem>>, vector<1x128x64xf32>
    %3 = vector.shape_cast %2 : vector<1x128x64xf32> to vector<128x64xf32>
    %cst = arith.constant dense<0.000000e+00> : vector<16x64xf32>
    %4 = tpu.matmul %1, %3, %cst {dimension_numbers = #tpu.dot_dimension_numbers<[1], [0], [0], [1], [0, 0, 1, 1], [], []>} : vector<16x128xf32>, vector<128x64xf32>, vector<16x64xf32> -> vector<16x64xf32>
    %c0_5 = arith.constant 0 : index
    %c0_6 = arith.constant 0 : index
    %c0_7 = arith.constant 0 : index
    %5 = vector.load %arg4[%c0_5, %c0_6, %c0_7] : memref<1x128x64xf32, #tpu.memory_space<vmem>>, vector<1x128x64xf32>
    %6 = vector.shape_cast %5 : vector<1x128x64xf32> to vector<128x64xf32>
    %cst_8 = arith.constant dense<0.000000e+00> : vector<16x64xf32>
    %7 = tpu.matmul %1, %6, %cst_8 {dimension_numbers = #tpu.dot_dimension_numbers<[1], [0], [0], [1], [0, 0, 1, 1], [], []>} : vector<16x128xf32>, vector<128x64xf32>, vector<16x64xf32> -> vector<16x64xf32>
    %c0_9 = arith.constant 0 : index
    %c0_10 = arith.constant 0 : index
    %c0_11 = arith.constant 0 : index
    %8 = vector.load %arg5[%c0_9, %c0_10, %c0_11] : memref<1x128x64xf32, #tpu.memory_space<vmem>>, vector<1x128x64xf32>
    %9 = vector.shape_cast %8 : vector<1x128x64xf32> to vector<128x64xf32>
    %cst_12 = arith.constant dense<0.000000e+00> : vector<16x64xf32>
    %10 = tpu.matmul %1, %9, %cst_12 {dimension_numbers = #tpu.dot_dimension_numbers<[1], [0], [0], [1], [0, 0, 1, 1], [], []>} : vector<16x128xf32>, vector<128x64xf32>, vector<16x64xf32> -> vector<16x64xf32>
    %cst_13 = arith.constant dense<0.000000e+00> : vector<16x16xf32>
    %11 = tpu.matmul %4, %7, %cst_13 {dimension_numbers = #tpu.dot_dimension_numbers<[1], [1], [0], [0], [0, 0, 1, 0], [], []>} : vector<16x64xf32>, vector<16x64xf32>, vector<16x16xf32> -> vector<16x16xf32>
    %cst_14 = arith.constant 1.250000e-01 : f32
    %12 = vector.broadcast %cst_14 : f32 to vector<16x16xf32>
    %13 = arith.mulf %11, %12 : vector<16x16xf32>
    %cst_15 = arith.constant dense<0xFF800000> : vector<16xf32>
    %14 = vector.multi_reduction <maximumf>, %13, %cst_15 [1] : vector<16x16xf32> to vector<16xf32>
    %15 = vector.shape_cast %14 : vector<16xf32> to vector<16x1xf32>
    %16 = vector.broadcast %15 : vector<16x1xf32> to vector<16x16xf32>
    %17 = arith.subf %13, %16 : vector<16x16xf32>
    %18 = math.exp %17 : vector<16x16xf32>
    %cst_16 = arith.constant dense<0.000000e+00> : vector<16xf32>
    %19 = vector.multi_reduction <add>, %18, %cst_16 [1] : vector<16x16xf32> to vector<16xf32>
    %20 = vector.shape_cast %19 : vector<16xf32> to vector<16x1xf32>
    %21 = vector.broadcast %20 : vector<16x1xf32> to vector<16x16xf32>
    %22 = arith.divf %18, %21 : vector<16x16xf32>
    %cst_17 = arith.constant dense<0.000000e+00> : vector<16x64xf32>
    %23 = tpu.matmul %22, %10, %cst_17 {dimension_numbers = #tpu.dot_dimension_numbers<[1], [0], [0], [1], [0, 0, 1, 1], [], []>} : vector<16x16xf32>, vector<16x64xf32>, vector<16x64xf32> -> vector<16x64xf32>
    %c0_18 = arith.constant 0 : index
    %c0_19 = arith.constant 0 : index
    %c0_20 = arith.constant 0 : index
    %24 = vector.load %arg6[%c0_18, %c0_19, %c0_20] : memref<1x64x128xf32, #tpu.memory_space<vmem>>, vector<1x64x128xf32>
    %25 = vector.shape_cast %24 : vector<1x64x128xf32> to vector<64x128xf32>
    %cst_21 = arith.constant dense<0.000000e+00> : vector<16x128xf32>
    %26 = tpu.matmul %23, %25, %cst_21 {dimension_numbers = #tpu.dot_dimension_numbers<[1], [0], [0], [1], [0, 0, 1, 1], [], []>} : vector<16x64xf32>, vector<64x128xf32>, vector<16x128xf32> -> vector<16x128xf32>
    %c0_i32 = arith.constant 0 : i32
    %27 = arith.cmpi eq, %arg1, %c0_i32 : i32
    %28 = arith.extui %27 : i1 to i32
    %c0_i32_22 = arith.constant 0 : i32
    %29 = arith.cmpi ne, %28, %c0_i32_22 : i32
    scf.if %29 {
      %c0_29 = arith.constant 0 : index
      %c0_30 = arith.constant 0 : index
      %36 = vector.load %arg7[%c0_29, %c0_30] : memref<1x128xf32, #tpu.memory_space<vmem>>, vector<1x128xf32>
      %37 = vector.shape_cast %36 : vector<1x128xf32> to vector<1x128xf32>
      %38 = vector.broadcast %37 : vector<1x128xf32> to vector<16x128xf32>
      %c0_31 = arith.constant 0 : index
      %c0_32 = arith.constant 0 : index
      %c0_33 = arith.constant 0 : index
      %39 = vector.load %arg8[%c0_31, %c0_32, %c0_33] : memref<1x16x128xf32, #tpu.memory_space<vmem>>, vector<1x16x128xf32>
      %40 = vector.shape_cast %39 : vector<1x16x128xf32> to vector<16x128xf32>
      %41 = vector.shape_cast %38 : vector<16x128xf32> to vector<1x16x128xf32>
      tpu.vector_store %arg8[%c0_31, %c0_32, %c0_33], %41 {strides = array<i32>} : memref<1x16x128xf32, #tpu.memory_space<vmem>>, vector<1x16x128xf32>,
    } else {
    }
    %c0_23 = arith.constant 0 : index
    %c0_24 = arith.constant 0 : index
    %c0_25 = arith.constant 0 : index
    %30 = vector.load %arg8[%c0_23, %c0_24, %c0_25] : memref<1x16x128xf32, #tpu.memory_space<vmem>>, vector<1x16x128xf32>
    %31 = vector.shape_cast %30 : vector<1x16x128xf32> to vector<16x128xf32>
    %32 = arith.addf %31, %26 : vector<16x128xf32>
    %c0_26 = arith.constant 0 : index
    %c0_27 = arith.constant 0 : index
    %c0_28 = arith.constant 0 : index
    %33 = vector.load %arg8[%c0_26, %c0_27, %c0_28] : memref<1x16x128xf32, #tpu.memory_space<vmem>>, vector<1x16x128xf32>
    %34 = vector.shape_cast %33 : vector<1x16x128xf32> to vector<16x128xf32>
    %35 = vector.shape_cast %32 : vector<16x128xf32> to vector<1x16x128xf32>
    tpu.vector_store %arg8[%c0_26, %c0_27, %c0_28], %35 {strides = array<i32>} : memref<1x16x128xf32, #tpu.memory_space<vmem>>, vector<1x16x128xf32>,
    return
  }
  func.func @transform_0(%arg0: i32, %arg1: i32) -> (i32, i32, i32) {
    %c0_i32 = arith.constant 0 : i32
    %c0_i32_0 = arith.constant 0 : i32
    %c0_i32_1 = arith.constant 0 : i32
    return %arg0, %c0_i32, %c0_i32_0 : i32, i32, i32
  }
  func.func @transform_1(%arg0: i32, %arg1: i32) -> (i32, i32, i32) {
    %c0_i32 = arith.constant 0 : i32
    %c0_i32_0 = arith.constant 0 : i32
    %c0_i32_1 = arith.constant 0 : i32
    return %arg1, %c0_i32, %c0_i32_0 : i32, i32, i32
  }
  func.func @transform_2(%arg0: i32, %arg1: i32) -> (i32, i32, i32) {
    %c0_i32 = arith.constant 0 : i32
    %c0_i32_0 = arith.constant 0 : i32
    %c0_i32_1 = arith.constant 0 : i32
    return %arg1, %c0_i32, %c0_i32_0 : i32, i32, i32
  }
  func.func @transform_3(%arg0: i32, %arg1: i32) -> (i32, i32, i32) {
    %c0_i32 = arith.constant 0 : i32
    %c0_i32_0 = arith.constant 0 : i32
    %c0_i32_1 = arith.constant 0 : i32
    return %arg1, %c0_i32, %c0_i32_0 : i32, i32, i32
  }
  func.func @transform_4(%arg0: i32, %arg1: i32) -> (i32, i32, i32) {
    %c0_i32 = arith.constant 0 : i32
    %c0_i32_0 = arith.constant 0 : i32
    %c0_i32_1 = arith.constant 0 : i32
    return %arg1, %c0_i32, %c0_i32_0 : i32, i32, i32
  }
  func.func @transform_5(%arg0: i32, %arg1: i32) -> (i32, i32) {
    %c0_i32 = arith.constant 0 : i32
    %c0_i32_0 = arith.constant 0 : i32
    %c0_i32_1 = arith.constant 0 : i32
    return %c0_i32, %c0_i32_0 : i32, i32
  }
  func.func @transform_6(%arg0: i32, %arg1: i32) -> (i32, i32, i32) {
    %c0_i32 = arith.constant 0 : i32
    %c0_i32_0 = arith.constant 0 : i32
    %c0_i32_1 = arith.constant 0 : i32
    return %arg0, %c0_i32, %c0_i32_0 : i32, i32, i32
  }
}

</mosaic_0001>

<llo_original>
// kernel: tpu_custom_call.1
$region0: #{tpu_custom_call.1}
  #allocation0 [shape = 'u32[]', space=smem, size = 0x4, offset = 0x4, fixed_abs, tag = 'smem constant byte address 0x4 - core index']
  #allocation1 [shape = 'u32[144,128]{1,0:T(1,128)}', space=vmem, size = 0x12000, scoped, tag = 'internal scratch']
  %s0 = inlined_call_operand.vmem [shape: f32[2,16,128], index: 0, kind: input, shape index: {}]
  %s1 = inlined_call_operand.vmem [shape: f32[4,128,64], index: 1, kind: input, shape index: {}]
  %s2 = inlined_call_operand.vmem [shape: f32[4,128,64], index: 2, kind: input, shape index: {}]
  %s3 = inlined_call_operand.vmem [shape: f32[4,128,64], index: 3, kind: input, shape index: {}]
  %s4 = inlined_call_operand.vmem [shape: f32[4,64,128], index: 4, kind: input, shape index: {}]
  %s5 = inlined_call_operand.vmem [shape: f32[1,128], index: 5, kind: input, shape index: {}]
  %s6 = inlined_call_operand.hbm [shape: f32[2,16,128], index: 6, kind: output, shape index: {}]
  %s7 = sld [smem:[#allocation0]]
  $region61: #{tpu_custom_call.1} parent=0
    _
  %s9 = ssub.s32 1, %s7
  %s10 = scalar_select 0, %s9, %s7
  $region1: #{tpu_custom_call.1} parent=0
    #allocation2 [shape = 'u8[16384]{0}', space=vmem, size = 0x4000, scoped, tag = 'output window, operand 0']
    #allocation3 [shape = 's32[2]{0}', space=sflag, size = 0x8, scoped, tag = 'scoped memory for tpu_custom_call.1']
    %11 = vsyncpa [#allocation3], 0
    %s12 = scalar_lea.sflag [#allocation3], 1
    %13 = vsyncpa %s12, 0
    loop: start=0, step=1, limit=10
    $region2: #{tpu_custom_call.1} parent=1 // loop_pre_header
      _
    $region3: #{tpu_custom_call.1} parent=1 // loop_header
      %s15 = sphi 0, %s19
      %p16 = scmp.ge.s32.totalorder %s15, 10
      %s22 = sphi 0, %s34
      %s23 = sphi 0, %s30
      %s24 = sphi 0, %s22
      %s25 = sphi 0, %s23
      %s26 = sphi 0, %s24
      %s27 = sphi 0, %s25
      %s37 = sphi 0, %s39
      %s40 = sphi 0, %s37
      %s41 = sphi 0, %s40
      %s57 = sphi 0, %s41
      %s63 = sphi 0, %s65
      %s66 = sphi 0, %s63
      %s67 = sphi 0, %s66
      %s83 = sphi 0, %s67
      %s89 = sphi 0, %s91
      %s92 = sphi 0, %s89
      %s93 = sphi 0, %s92
      %s109 = sphi 0, %s93
      %s115 = sphi 0, %s117
      %s118 = sphi 0, %s115
      %s119 = sphi 0, %s118
      %s135 = sphi 0, %s119
      %s141 = sphi 0, %s143
      %s144 = sphi 0, %s141
      %s145 = sphi 0, %s144
      %s161 = sphi 0, %s145
      %s165 = sphi 0, %s165
      %s167 = sphi 0, %s165
      %s168 = sphi 0, %s167
      %s182 = sphi 0, %s168
      %s188 = sphi 0, %s190
      %s191 = sphi 0, %s188
      %s192 = sphi 0, %s191
      %s208 = sphi 0, %s192
    $region4: #{tpu_custom_call.1} parent=1 // loop_header_branch
      %18 = sbr.rel (%p16) target = $region8
    $region5: #{tpu_custom_call.1} parent=1 // loop_body
      %s20 = ssub.s32 %s15, 1
      %s21 = ssub.s32 %s15, 2
      %s28 = sadd.s32 1, %s23
      %p29 = scmp.ge.s32.totalorder %s28, 4
      %s30 = scalar_select %p29, 0, %s28
      %s31 = sadd.s32 1, %s22
      %s32 = scalar_select %p29, %s31, %s22
      %p33 = scmp.ge.s32.totalorder %s32, 2
      %s34 = scalar_select %p33, 0, %s32
      %s35 = ssub.s32 %s22, %s34
      %p36 = scmp.eq.s32.totalorder %s35, 0
      %s38 = sadd.s32 %s37, 1
      %s39 = scalar_select %p36, %s37, %s38
      %p42 = pneg %p36
      %p43 = scmp.eq.s32.totalorder %s15, 7
      %p44 = por %p42, %p43
      %p45 = scmp.ne.s32.totalorder %s37, %s40
      %p46 = scmp.eq.s32.totalorder %s15, 0
      %p47 = por %p45, %p46
      %p48 = scmp.ne.s32.totalorder %s37, %s40
      %p49 = scmp.eq.s32.totalorder %s20, 7
      %p50 = por %p48, %p49
      %p51 = scmp.ne.s32.totalorder %s40, %s41
      %p52 = scmp.eq.s32.totalorder %s20, 0
      %p53 = por %p51, %p52
      %p54 = scmp.ne.s32.totalorder %s40, %s41
      %p55 = scmp.eq.s32.totalorder %s21, 7
      %p56 = por %p54, %p55
      %p58 = scmp.ne.s32.totalorder %s41, %s57
      %p59 = scmp.eq.s32.totalorder %s21, 0
      %p60 = por %p58, %p59
      %s61 = ssub.s32 %s23, %s30
      %p62 = scmp.eq.s32.totalorder %s61, 0
      %s64 = sadd.s32 %s63, 1
      %s65 = scalar_select %p62, %s63, %s64
      %p68 = pneg %p62
      %p69 = scmp.eq.s32.totalorder %s15, 7
      %p70 = por %p68, %p69
      %p71 = scmp.ne.s32.totalorder %s63, %s66
      %p72 = scmp.eq.s32.totalorder %s15, 0
      %p73 = por %p71, %p72
      %p74 = scmp.ne.s32.totalorder %s63, %s66
      %p75 = scmp.eq.s32.totalorder %s20, 7
      %p76 = por %p74, %p75
      %p77 = scmp.ne.s32.totalorder %s66, %s67
      %p78 = scmp.eq.s32.totalorder %s20, 0
      %p79 = por %p77, %p78
      %p80 = scmp.ne.s32.totalorder %s66, %s67
      %p81 = scmp.eq.s32.totalorder %s21, 7
      %p82 = por %p80, %p81
      %p84 = scmp.ne.s32.totalorder %s67, %s83
      %p85 = scmp.eq.s32.totalorder %s21, 0
      %p86 = por %p84, %p85
      %s87 = ssub.s32 %s23, %s30
      %p88 = scmp.eq.s32.totalorder %s87, 0
      %s90 = sadd.s32 %s89, 1
      %s91 = scalar_select %p88, %s89, %s90
      %p94 = pneg %p88
      %p95 = scmp.eq.s32.totalorder %s15, 7
      %p96 = por %p94, %p95
      %p97 = scmp.ne.s32.totalorder %s89, %s92
      %p98 = scmp.eq.s32.totalorder %s15, 0
      %p99 = por %p97, %p98
      %p100 = scmp.ne.s32.totalorder %s89, %s92
      %p101 = scmp.eq.s32.totalorder %s20, 7
      %p102 = por %p100, %p101
      %p103 = scmp.ne.s32.totalorder %s92, %s93
      %p104 = scmp.eq.s32.totalorder %s20, 0
      %p105 = por %p103, %p104
      %p106 = scmp.ne.s32.totalorder %s92, %s93
      %p107 = scmp.eq.s32.totalorder %s21, 7
      %p108 = por %p106, %p107
      %p110 = scmp.ne.s32.totalorder %s93, %s109
      %p111 = scmp.eq.s32.totalorder %s21, 0
      %p112 = por %p110, %p111
      %s113 = ssub.s32 %s23, %s30
      %p114 = scmp.eq.s32.totalorder %s113, 0
      %s116 = sadd.s32 %s115, 1
      %s117 = scalar_select %p114, %s115, %s116
      %p120 = pneg %p114
      %p121 = scmp.eq.s32.totalorder %s15, 7
      %p122 = por %p120, %p121
      %p123 = scmp.ne.s32.totalorder %s115, %s118
      %p124 = scmp.eq.s32.totalorder %s15, 0
      %p125 = por %p123, %p124
      %p126 = scmp.ne.s32.totalorder %s115, %s118
      %p127 = scmp.eq.s32.totalorder %s20, 7
      %p128 = por %p126, %p127
      %p129 = scmp.ne.s32.totalorder %s118, %s119
      %p130 = scmp.eq.s32.totalorder %s20, 0
      %p131 = por %p129, %p130
      %p132 = scmp.ne.s32.totalorder %s118, %s119
      %p133 = scmp.eq.s32.totalorder %s21, 7
      %p134 = por %p132, %p133
      %p136 = scmp.ne.s32.totalorder %s119, %s135
      %p137 = scmp.eq.s32.totalorder %s21, 0
      %p138 = por %p136, %p137
      %s139 = ssub.s32 %s23, %s30
      %p140 = scmp.eq.s32.totalorder %s139, 0
      %s142 = sadd.s32 %s141, 1
      %s143 = scalar_select %p140, %s141, %s142
      %p146 = pneg %p140
      %p147 = scmp.eq.s32.totalorder %s15, 7
      %p148 = por %p146, %p147
      %p149 = scmp.ne.s32.totalorder %s141, %s144
      %p150 = scmp.eq.s32.totalorder %s15, 0
      %p151 = por %p149, %p150
      %p152 = scmp.ne.s32.totalorder %s141, %s144
      %p153 = scmp.eq.s32.totalorder %s20, 7
      %p154 = por %p152, %p153
      %p155 = scmp.ne.s32.totalorder %s144, %s145
      %p156 = scmp.eq.s32.totalorder %s20, 0
      %p157 = por %p155, %p156
      %p158 = scmp.ne.s32.totalorder %s144, %s145
      %p159 = scmp.eq.s32.totalorder %s21, 7
      %p160 = por %p158, %p159
      %p162 = scmp.ne.s32.totalorder %s145, %s161
      %p163 = scmp.eq.s32.totalorder %s21, 0
      %p164 = por %p162, %p163
      %s166 = sadd.s32 %s165, 1
      %p169 = scmp.eq.s32.totalorder %s15, 7
      %p170 = scmp.ne.s32.totalorder %s165, %s167
      %p171 = scmp.eq.s32.totalorder %s15, 0
      %p172 = por %p170, %p171
      %p173 = scmp.ne.s32.totalorder %s165, %s167
      %p174 = scmp.eq.s32.totalorder %s20, 7
      %p175 = por %p173, %p174
      %p176 = scmp.ne.s32.totalorder %s167, %s168
      %p177 = scmp.eq.s32.totalorder %s20, 0
      %p178 = por %p176, %p177
      %p179 = scmp.ne.s32.totalorder %s167, %s168
      %p180 = scmp.eq.s32.totalorder %s21, 7
      %p181 = por %p179, %p180
      %p183 = scmp.ne.s32.totalorder %s168, %s182
      %p184 = scmp.eq.s32.totalorder %s21, 0
      %p185 = por %p183, %p184
      %s186 = ssub.s32 %s22, %s34
      %p187 = scmp.eq.s32.totalorder %s186, 0
      %s189 = sadd.s32 %s188, 1
      %s190 = scalar_select %p187, %s188, %s189
      %p193 = pneg %p187
      %p194 = scmp.eq.s32.totalorder %s15, 7
      %p195 = por %p193, %p194
      %p196 = scmp.ne.s32.totalorder %s188, %s191
      %p197 = scmp.eq.s32.totalorder %s15, 0
      %p198 = por %p196, %p197
      %p199 = scmp.ne.s32.totalorder %s188, %s191
      %p200 = scmp.eq.s32.totalorder %s20, 7
      %p201 = por %p199, %p200
      %p202 = scmp.ne.s32.totalorder %s191, %s192
      %p203 = scmp.eq.s32.totalorder %s20, 0
      %p204 = por %p202, %p203
      %p205 = scmp.ne.s32.totalorder %s191, %s192
      %p206 = scmp.eq.s32.totalorder %s21, 7
      %p207 = por %p205, %p206
      %p209 = scmp.ne.s32.totalorder %s192, %s208
      %p210 = scmp.eq.s32.totalorder %s21, 0
      %p211 = por %p209, %p210
      %p212 = scmp.le.s32.totalorder 1, %s15
      %p213 = scmp.lt.s32.totalorder %s15, 9
      %p214 = pnand %p212, %p213
      %p215 = pneg %p214
      // Predicated region
      $region9: #{tpu_custom_call.1} parent=5 // pred_check
        _
      $region10: #{tpu_custom_call.1} parent=5 // pred_check_branch
        %217 = sbr.rel (%p214) target = $region12
      $region11: #{tpu_custom_call.1} parent=5 // pred_region
        %s218 = ssub.s32 %s15, 1
        // Predicated region
        $region13: #{tpu_custom_call.1} parent=11 // pred_check
          %p219 = pneg %p178
        $region14: #{tpu_custom_call.1} parent=11 // pred_check_branch
          %221 = sbr.rel (%p219) target = $region16
        $region15: #{tpu_custom_call.1} parent=11 // pred_region
          _
        $region16: #{tpu_custom_call.1} parent=11 // pred_fallthru
          _
      $region12: #{tpu_custom_call.1} parent=5 // pred_fallthru
        _
      %p222 = scmp.lt.s32.totalorder %s15, 8
      // Predicated region
      $region17: #{tpu_custom_call.1} parent=5 // pred_check
        %p223 = pneg %p222
      $region18: #{tpu_custom_call.1} parent=5 // pred_check_branch
        %225 = sbr.rel (%p223) target = $region20
      $region19: #{tpu_custom_call.1} parent=5 // pred_region
        // Predicated region
        $region21: #{tpu_custom_call.1} parent=19 // pred_check
          %p226 = pneg %p47
        $region22: #{tpu_custom_call.1} parent=19 // pred_check_branch
          %228 = sbr.rel (%p226) target = $region24
        $region23: #{tpu_custom_call.1} parent=19 // pred_region
          %p229 = scmp.lt.s32.totalorder %s22, 1
          %s230 = scalar_select %p229, %s22, 1
          %s231 = smul.addr %s230, 2
          %s232 = smul.addr %s231, 8
          %s233 = scalar_lea.vmem %s0, %s232
        $region24: #{tpu_custom_call.1} parent=19 // pred_fallthru
          _
        // Predicated region
        $region25: #{tpu_custom_call.1} parent=19 // pred_check
          %p234 = pneg %p73
        $region26: #{tpu_custom_call.1} parent=19 // pred_check_branch
          %236 = sbr.rel (%p234) target = $region28
        $region27: #{tpu_custom_call.1} parent=19 // pred_region
          %p237 = scmp.lt.s32.totalorder %s23, 3
          %s238 = scalar_select %p237, %s23, 3
          %s239 = smul.addr %s238, 16
          %s240 = smul.addr %s239, 8
          %s241 = scalar_lea.vmem %s1, %s240
        $region28: #{tpu_custom_call.1} parent=19 // pred_fallthru
          _
        // Predicated region
        $region29: #{tpu_custom_call.1} parent=19 // pred_check
          %p242 = pneg %p99
        $region30: #{tpu_custom_call.1} parent=19 // pred_check_branch
          %244 = sbr.rel (%p242) target = $region32
        $region31: #{tpu_custom_call.1} parent=19 // pred_region
          %p245 = scmp.lt.s32.totalorder %s23, 3
          %s246 = scalar_select %p245, %s23, 3
          %s247 = smul.addr %s246, 16
          %s248 = smul.addr %s247, 8
          %s249 = scalar_lea.vmem %s2, %s248
        $region32: #{tpu_custom_call.1} parent=19 // pred_fallthru
          _
        // Predicated region
        $region33: #{tpu_custom_call.1} parent=19 // pred_check
          %p250 = pneg %p125
        $region34: #{tpu_custom_call.1} parent=19 // pred_check_branch
          %252 = sbr.rel (%p250) target = $region36
        $region35: #{tpu_custom_call.1} parent=19 // pred_region
          %p253 = scmp.lt.s32.totalorder %s23, 3
          %s254 = scalar_select %p253, %s23, 3
          %s255 = smul.addr %s254, 16
          %s256 = smul.addr %s255, 8
          %s257 = scalar_lea.vmem %s3, %s256
        $region36: #{tpu_custom_call.1} parent=19 // pred_fallthru
          _
        // Predicated region
        $region37: #{tpu_custom_call.1} parent=19 // pred_check
          %p258 = pneg %p151
        $region38: #{tpu_custom_call.1} parent=19 // pred_check_branch
          %260 = sbr.rel (%p258) target = $region40
        $region39: #{tpu_custom_call.1} parent=19 // pred_region
          %p261 = scmp.lt.s32.totalorder %s23, 3
          %s262 = scalar_select %p261, %s23, 3
          %s263 = smul.addr %s262, 8
          %s264 = smul.addr %s263, 8
          %s265 = scalar_lea.vmem %s4, %s264
        $region40: #{tpu_custom_call.1} parent=19 // pred_fallthru
          _
      $region20: #{tpu_custom_call.1} parent=5 // pred_fallthru
        _
      %p266 = scmp.le.s32.totalorder 1, %s15
      %p267 = scmp.lt.s32.totalorder %s15, 9
      %p268 = pnand %p266, %p267
      %p269 = pneg %p268
      // Predicated region
      $region41: #{tpu_custom_call.1} parent=5 // pred_check
        _
      $region42: #{tpu_custom_call.1} parent=5 // pred_check_branch
        %271 = sbr.rel (%p268) target = $region44
      $region43: #{tpu_custom_call.1} parent=5 // pred_region
        %s272 = ssub.s32 %s15, 1
        %p273 = scmp.lt.s32.totalorder %s24, 1
        %s274 = scalar_select %p273, %s24, 1
        %s275 = smul.addr %s274, 2
        %s276 = smul.addr %s275, 8
        %s277 = scalar_lea.vmem %s0, %s276
        %p278 = pneg %p53
        %p279 = pneg %p50
        %p280 = scmp.lt.s32.totalorder %s25, 3
        %s281 = scalar_select %p280, %s25, 3
        %s282 = smul.addr %s281, 16
        %s283 = smul.addr %s282, 8
        %s284 = scalar_lea.vmem %s1, %s283
        %p285 = pneg %p79
        %p286 = pneg %p76
        %p287 = scmp.lt.s32.totalorder %s25, 3
        %s288 = scalar_select %p287, %s25, 3
        %s289 = smul.addr %s288, 16
        %s290 = smul.addr %s289, 8
        %s291 = scalar_lea.vmem %s2, %s290
        %p292 = pneg %p105
        %p293 = pneg %p102
        %p294 = scmp.lt.s32.totalorder %s25, 3
        %s295 = scalar_select %p294, %s25, 3
        %s296 = smul.addr %s295, 16
        %s297 = smul.addr %s296, 8
        %s298 = scalar_lea.vmem %s3, %s297
        %p299 = pneg %p131
        %p300 = pneg %p128
        %p301 = scmp.lt.s32.totalorder %s25, 3
        %s302 = scalar_select %p301, %s25, 3
        %s303 = smul.addr %s302, 8
        %s304 = smul.addr %s303, 8
        %s305 = scalar_lea.vmem %s4, %s304
        %p306 = pneg %p157
        %p307 = pneg %p154
        %p308 = pneg %p178
        %p309 = pneg %p175
        %p310 = pneg %p204
        %p311 = pneg %p201
        %s312 = sand.u32 %s191, 1
        %s313 = scalar_lea.sflag [#allocation3], %s312
        %s314 = sand.u32 %s191, 1
        %s315 = smul.addr %s314, 16
        %s316 = scalar_lea.vmem [#allocation2], %s315
        %p317 = scmp.lt.s32.totalorder %s24, 1
        %s318 = scalar_select %p317, %s24, 1
        %s319 = smul.addr %s318, 2
        %s320 = smul.addr %s319, 8
        %s321 = scalar_lea.vmem %s0, %s320
        %p322 = scmp.lt.s32.totalorder %s25, 3
        %s323 = scalar_select %p322, %s25, 3
        %s324 = smul.addr %s323, 16
        %s325 = smul.addr %s324, 8
        %s326 = scalar_lea.vmem %s1, %s325
        %p327 = scmp.lt.s32.totalorder %s25, 3
        %s328 = scalar_select %p327, %s25, 3
        %s329 = smul.addr %s328, 16
        %s330 = smul.addr %s329, 8
        %s331 = scalar_lea.vmem %s2, %s330
        %p332 = scmp.lt.s32.totalorder %s25, 3
        %s333 = scalar_select %p332, %s25, 3
        %s334 = smul.addr %s333, 16
        %s335 = smul.addr %s334, 8
        %s336 = scalar_lea.vmem %s3, %s335
        %p337 = scmp.lt.s32.totalorder %s25, 3
        %s338 = scalar_select %p337, %s25, 3
        %s339 = smul.addr %s338, 8
        %s340 = smul.addr %s339, 8
        %s341 = scalar_lea.vmem %s4, %s340
        %v342 = vld [vmem:[%s321] sm:$0xff]
        %v343 = vld [vmem:[%s321 + $0x8] sm:$0xff]
        %v344 = vld [vmem:[%s326] sm:$0xff]
        %v345 = vld [vmem:[%s326 + $0x8] sm:$0xff]
        %v346 = vld [vmem:[%s326 + $0x10] sm:$0xff]
        %v347 = vld [vmem:[%s326 + $0x18] sm:$0xff]
        %v348 = vld [vmem:[%s326 + $0x20] sm:$0xff]
        %v349 = vld [vmem:[%s326 + $0x28] sm:$0xff]
        %v350 = vld [vmem:[%s326 + $0x30] sm:$0xff]
        %v351 = vld [vmem:[%s326 + $0x38] sm:$0xff]
        %v352 = vld [vmem:[%s326 + $0x40] sm:$0xff]
        %v353 = vld [vmem:[%s326 + $0x48] sm:$0xff]
        %v354 = vld [vmem:[%s326 + $0x50] sm:$0xff]
        %v355 = vld [vmem:[%s326 + $0x58] sm:$0xff]
        %v356 = vld [vmem:[%s326 + $0x60] sm:$0xff]
        %v357 = vld [vmem:[%s326 + $0x68] sm:$0xff]
        %v358 = vld [vmem:[%s326 + $0x70] sm:$0xff]
        %v359 = vld [vmem:[%s326 + $0x78] sm:$0xff]
        %360 = vmatprep.subr.mxu0 0.0
        %361 = vmatpush1.msra.mxu0 %v344
        %362 = vmatprep.subr.mxu0 0.0
        %363 = vmatpush1.msra.mxu0 %v345
        %364 = vmatprep.subr.mxu0 0.0
        %365 = vmatpush1.msra.mxu0 %v346
        %366 = vmatprep.subr.mxu0 0.0
        %367 = vmatpush1.msra.mxu0 %v347
        %368 = vmatprep.subr.mxu0 0.0
        %369 = vmatpush1.msra.mxu0 %v348
        %370 = vmatprep.subr.mxu0 0.0
        %371 = vmatpush1.msra.mxu0 %v349
        %372 = vmatprep.subr.mxu0 0.0
        %373 = vmatpush1.msra.mxu0 %v350
        %374 = vmatprep.subr.mxu0 0.0
        %375 = vmatpush1.msra.mxu0 %v351
        %376 = vmatprep.subr.mxu0 0.0
        %377 = vmatpush1.msra.mxu0 %v352
        %378 = vmatprep.subr.mxu0 0.0
        %379 = vmatpush1.msra.mxu0 %v353
        %380 = vmatprep.subr.mxu0 0.0
        %381 = vmatpush1.msra.mxu0 %v354
        %382 = vmatprep.subr.mxu0 0.0
        %383 = vmatpush1.msra.mxu0 %v355
        %384 = vmatprep.subr.mxu0 0.0
        %385 = vmatpush1.msra.mxu0 %v356
        %386 = vmatprep.subr.mxu0 0.0
        %387 = vmatpush1.msra.mxu0 %v357
        %388 = vmatprep.subr.mxu0 0.0
        %389 = vmatpush1.msra.mxu0 %v358
        %390 = vmatprep.subr.mxu0 0.0
        %391 = vmatpush1.msra.mxu0 %v359
        %392 = vmatprep.subr.mxu0 0.0
        %393 = vmatpush1.msra.mxu0 0.0
        %394 = vmatprep.subr.mxu0 0.0
        %395 = vmatpush1.msra.mxu0 0.0
        %396 = vmatprep.subr.mxu0 0.0
        %397 = vmatpush1.msra.mxu0 0.0
        %398 = vmatprep.subr.mxu0 0.0
        %399 = vmatpush1.msra.mxu0 0.0
        %400 = vmatprep.subr.mxu0 0.0
        %401 = vmatpush1.msra.mxu0 0.0
        %402 = vmatprep.subr.mxu0 0.0
        %403 = vmatpush1.msra.mxu0 0.0
        %404 = vmatprep.subr.mxu0 0.0
        %405 = vmatpush1.msra.mxu0 0.0
        %406 = vmatprep.subr.mxu0 0.0
        %407 = vmatpush1.msra.mxu0 0.0
        %408 = vmatprep.subr.mxu0 0.0
        %409 = vmatpush1.msra.mxu0 0.0
        %410 = vmatprep.subr.mxu0 0.0
        %411 = vmatpush1.msra.mxu0 0.0
        %412 = vmatprep.subr.mxu0 0.0
        %413 = vmatpush1.msra.mxu0 0.0
        %414 = vmatprep.subr.mxu0 0.0
        %415 = vmatpush1.msra.mxu0 0.0
        %416 = vmatprep.subr.mxu0 0.0
        %417 = vmatpush1.msra.mxu0 0.0
        %418 = vmatprep.subr.mxu0 0.0
        %419 = vmatpush1.msra.mxu0 0.0
        %420 = vmatprep.subr.mxu0 0.0
        %421 = vmatpush1.msra.mxu0 0.0
        %422 = vmatprep.subr.mxu0 0.0
        %423 = vmatpush1.msra.mxu0 0.0
        %424 = vmatprep.mubr.f32.mxu0 0.0
        %425 = vmatmul.mubr.f32.gmra.mrb[0].mxu0 %v342
        %v426 = vpop.f32.mrb[0].mxu0
        %v427 = vadd.f32 0.0, %v426
        %v428 = vpop.f32.mrb[0].mxu0
        %429 = vmatprep.mubr.f32.mxu0 0.0
        %430 = vmatmul.mubr.f32.gmra.mrb[0].mxu0 %v343
        %v431 = vpop.f32.mrb[0].mxu0
        %v432 = vadd.f32 0.0, %v431
        %v433 = vpop.f32.mrb[0].mxu0
        %434 = vdwg.mxu0
        %v435 = vld [vmem:[%s331] sm:$0xff]
        %v436 = vld [vmem:[%s331 + $0x8] sm:$0xff]
        %v437 = vld [vmem:[%s331 + $0x10] sm:$0xff]
        %v438 = vld [vmem:[%s331 + $0x18] sm:$0xff]
        %v439 = vld [vmem:[%s331 + $0x20] sm:$0xff]
        %v440 = vld [vmem:[%s331 + $0x28] sm:$0xff]
        %v441 = vld [vmem:[%s331 + $0x30] sm:$0xff]
        %v442 = vld [vmem:[%s331 + $0x38] sm:$0xff]
        %v443 = vld [vmem:[%s331 + $0x40] sm:$0xff]
        %v444 = vld [vmem:[%s331 + $0x48] sm:$0xff]
        %v445 = vld [vmem:[%s331 + $0x50] sm:$0xff]
        %v446 = vld [vmem:[%s331 + $0x58] sm:$0xff]
        %v447 = vld [vmem:[%s331 + $0x60] sm:$0xff]
        %v448 = vld [vmem:[%s331 + $0x68] sm:$0xff]
        %v449 = vld [vmem:[%s331 + $0x70] sm:$0xff]
        %v450 = vld [vmem:[%s331 + $0x78] sm:$0xff]
        %451 = vmatprep.subr.mxu0 0.0
        %452 = vmatpush1.msra.mxu0 %v435
        %453 = vmatprep.subr.mxu0 0.0
        %454 = vmatpush1.msra.mxu0 %v436
        %455 = vmatprep.subr.mxu0 0.0
        %456 = vmatpush1.msra.mxu0 %v437
        %457 = vmatprep.subr.mxu0 0.0
        %458 = vmatpush1.msra.mxu0 %v438
        %459 = vmatprep.subr.mxu0 0.0
        %460 = vmatpush1.msra.mxu0 %v439
        %461 = vmatprep.subr.mxu0 0.0
        %462 = vmatpush1.msra.mxu0 %v440
        %463 = vmatprep.subr.mxu0 0.0
        %464 = vmatpush1.msra.mxu0 %v441
        %465 = vmatprep.subr.mxu0 0.0
        %466 = vmatpush1.msra.mxu0 %v442
        %467 = vmatprep.subr.mxu0 0.0
        %468 = vmatpush1.msra.mxu0 %v443
        %469 = vmatprep.subr.mxu0 0.0
        %470 = vmatpush1.msra.mxu0 %v444
        %471 = vmatprep.subr.mxu0 0.0
        %472 = vmatpush1.msra.mxu0 %v445
        %473 = vmatprep.subr.mxu0 0.0
        %474 = vmatpush1.msra.mxu0 %v446
        %475 = vmatprep.subr.mxu0 0.0
        %476 = vmatpush1.msra.mxu0 %v447
        %477 = vmatprep.subr.mxu0 0.0
        %478 = vmatpush1.msra.mxu0 %v448
        %479 = vmatprep.subr.mxu0 0.0
        %480 = vmatpush1.msra.mxu0 %v449
        %481 = vmatprep.subr.mxu0 0.0
        %482 = vmatpush1.msra.mxu0 %v450
        %483 = vmatprep.subr.mxu0 0.0
        %484 = vmatpush1.msra.mxu0 0.0
        %485 = vmatprep.subr.mxu0 0.0
        %486 = vmatpush1.msra.mxu0 0.0
        %487 = vmatprep.subr.mxu0 0.0
        %488 = vmatpush1.msra.mxu0 0.0
        %489 = vmatprep.subr.mxu0 0.0
        %490 = vmatpush1.msra.mxu0 0.0
        %491 = vmatprep.subr.mxu0 0.0
        %492 = vmatpush1.msra.mxu0 0.0
        %493 = vmatprep.subr.mxu0 0.0
        %494 = vmatpush1.msra.mxu0 0.0
        %495 = vmatprep.subr.mxu0 0.0
        %496 = vmatpush1.msra.mxu0 0.0
        %497 = vmatprep.subr.mxu0 0.0
        %498 = vmatpush1.msra.mxu0 0.0
        %499 = vmatprep.subr.mxu0 0.0
        %500 = vmatpush1.msra.mxu0 0.0
        %501 = vmatprep.subr.mxu0 0.0
        %502 = vmatpush1.msra.mxu0 0.0
        %503 = vmatprep.subr.mxu0 0.0
        %504 = vmatpush1.msra.mxu0 0.0
        %505 = vmatprep.subr.mxu0 0.0
        %506 = vmatpush1.msra.mxu0 0.0
        %507 = vmatprep.subr.mxu0 0.0
        %508 = vmatpush1.msra.mxu0 0.0
        %509 = vmatprep.subr.mxu0 0.0
        %510 = vmatpush1.msra.mxu0 0.0
        %511 = vmatprep.subr.mxu0 0.0
        %512 = vmatpush1.msra.mxu0 0.0
        %513 = vmatprep.subr.mxu0 0.0
        %514 = vmatpush1.msra.mxu0 0.0
        %515 = vmatprep.mubr.f32.mxu0 0.0
        %516 = vmatmul.mubr.f32.gmra.mrb[0].mxu0 %v342
        %v517 = vpop.f32.mrb[0].mxu0
        %v518 = vadd.f32 0.0, %v517
        %v519 = vpop.f32.mrb[0].mxu0
        %520 = vmatprep.mubr.f32.mxu0 0.0
        %521 = vmatmul.mubr.f32.gmra.mrb[0].mxu0 %v343
        %v522 = vpop.f32.mrb[0].mxu0
        %v523 = vadd.f32 0.0, %v522
        %v524 = vpop.f32.mrb[0].mxu0
        %525 = vdwg.mxu0
        %v526 = vld [vmem:[%s336] sm:$0xff]
        %v527 = vld [vmem:[%s336 + $0x8] sm:$0xff]
        %v528 = vld [vmem:[%s336 + $0x10] sm:$0xff]
        %v529 = vld [vmem:[%s336 + $0x18] sm:$0xff]
        %v530 = vld [vmem:[%s336 + $0x20] sm:$0xff]
        %v531 = vld [vmem:[%s336 + $0x28] sm:$0xff]
        %v532 = vld [vmem:[%s336 + $0x30] sm:$0xff]
        %v533 = vld [vmem:[%s336 + $0x38] sm:$0xff]
        %v534 = vld [vmem:[%s336 + $0x40] sm:$0xff]
        %v535 = vld [vmem:[%s336 + $0x48] sm:$0xff]
        %v536 = vld [vmem:[%s336 + $0x50] sm:$0xff]
        %v537 = vld [vmem:[%s336 + $0x58] sm:$0xff]
        %v538 = vld [vmem:[%s336 + $0x60] sm:$0xff]
        %v539 = vld [vmem:[%s336 + $0x68] sm:$0xff]
        %v540 = vld [vmem:[%s336 + $0x70] sm:$0xff]
        %v541 = vld [vmem:[%s336 + $0x78] sm:$0xff]
        %542 = vmatprep.subr.mxu0 0.0
        %543 = vmatpush1.msra.mxu0 %v526
        %544 = vmatprep.subr.mxu0 0.0
        %545 = vmatpush1.msra.mxu0 %v527
        %546 = vmatprep.subr.mxu0 0.0
        %547 = vmatpush1.msra.mxu0 %v528
        %548 = vmatprep.subr.mxu0 0.0
        %549 = vmatpush1.msra.mxu0 %v529
        %550 = vmatprep.subr.mxu0 0.0
        %551 = vmatpush1.msra.mxu0 %v530
        %552 = vmatprep.subr.mxu0 0.0
        %553 = vmatpush1.msra.mxu0 %v531
        %554 = vmatprep.subr.mxu0 0.0
        %555 = vmatpush1.msra.mxu0 %v532
        %556 = vmatprep.subr.mxu0 0.0
        %557 = vmatpush1.msra.mxu0 %v533
        %558 = vmatprep.subr.mxu0 0.0
        %559 = vmatpush1.msra.mxu0 %v534
        %560 = vmatprep.subr.mxu0 0.0
        %561 = vmatpush1.msra.mxu0 %v535
        %562 = vmatprep.subr.mxu0 0.0
        %563 = vmatpush1.msra.mxu0 %v536
        %564 = vmatprep.subr.mxu0 0.0
        %565 = vmatpush1.msra.mxu0 %v537
        %566 = vmatprep.subr.mxu0 0.0
        %567 = vmatpush1.msra.mxu0 %v538
        %568 = vmatprep.subr.mxu0 0.0
        %569 = vmatpush1.msra.mxu0 %v539
        %570 = vmatprep.subr.mxu0 0.0
        %571 = vmatpush1.msra.mxu0 %v540
        %572 = vmatprep.subr.mxu0 0.0
        %573 = vmatpush1.msra.mxu0 %v541
        %574 = vmatprep.subr.mxu0 0.0
        %575 = vmatpush1.msra.mxu0 0.0
        %576 = vmatprep.subr.mxu0 0.0
        %577 = vmatpush1.msra.mxu0 0.0
        %578 = vmatprep.subr.mxu0 0.0
        %579 = vmatpush1.msra.mxu0 0.0
        %580 = vmatprep.subr.mxu0 0.0
        %581 = vmatpush1.msra.mxu0 0.0
        %582 = vmatprep.subr.mxu0 0.0
        %583 = vmatpush1.msra.mxu0 0.0
        %584 = vmatprep.subr.mxu0 0.0
        %585 = vmatpush1.msra.mxu0 0.0
        %586 = vmatprep.subr.mxu0 0.0
        %587 = vmatpush1.msra.mxu0 0.0
        %588 = vmatprep.subr.mxu0 0.0
        %589 = vmatpush1.msra.mxu0 0.0
        %590 = vmatprep.subr.mxu0 0.0
        %591 = vmatpush1.msra.mxu0 0.0
        %592 = vmatprep.subr.mxu0 0.0
        %593 = vmatpush1.msra.mxu0 0.0
        %594 = vmatprep.subr.mxu0 0.0
        %595 = vmatpush1.msra.mxu0 0.0
        %596 = vmatprep.subr.mxu0 0.0
        %597 = vmatpush1.msra.mxu0 0.0
        %598 = vmatprep.subr.mxu0 0.0
        %599 = vmatpush1.msra.mxu0 0.0
        %600 = vmatprep.subr.mxu0 0.0
        %601 = vmatpush1.msra.mxu0 0.0
        %602 = vmatprep.subr.mxu0 0.0
        %603 = vmatpush1.msra.mxu0 0.0
        %604 = vmatprep.subr.mxu0 0.0
        %605 = vmatpush1.msra.mxu0 0.0
        %606 = vmatprep.mubr.f32.mxu0 0.0
        %607 = vmatmul.mubr.f32.gmra.mrb[0].mxu0 %v342
        %v608 = vpop.f32.mrb[0].mxu0
        %v609 = vadd.f32 0.0, %v608
        %v610 = vpop.f32.mrb[0].mxu0
        %611 = vmatprep.mubr.f32.mxu0 0.0
        %612 = vmatmul.mubr.f32.gmra.mrb[0].mxu0 %v343
        %v613 = vpop.f32.mrb[0].mxu0
        %v614 = vadd.f32 0.0, %v613
        %v615 = vpop.f32.mrb[0].mxu0
        %616 = vdwg.mxu0
        %vm617 = vcmask 523264
        %v619 = vsel %vm617, %v427, 0
        %v622 = vsel %vm617, %v432, 0
        %v625 = vsel %vm617, %v518, 0
        %v628 = vsel %vm617, %v523, 0
        %630 = vmatprep.subr.mxu0 0.0
        %631 = vmatpush1.xpose.msra.mxu0 %v625
        %632 = vmatprep.subr.mxu0 0.0
        %633 = vmatpush1.xpose.msra.mxu0 %v628
        %634 = vmatprep.subr.mxu0 0.0
        %635 = vmatpush1.xpose.msra.mxu0 0.0
        %636 = vmatprep.subr.mxu0 0.0
        %637 = vmatpush1.xpose.msra.mxu0 0.0
        %638 = vmatprep.subr.mxu0 0.0
        %639 = vmatpush1.xpose.msra.mxu0 0.0
        %640 = vmatprep.subr.mxu0 0.0
        %641 = vmatpush1.xpose.msra.mxu0 0.0
        %642 = vmatprep.subr.mxu0 0.0
        %643 = vmatpush1.xpose.msra.mxu0 0.0
        %644 = vmatprep.subr.mxu0 0.0
        %645 = vmatpush1.xpose.msra.mxu0 0.0
        %646 = vmatprep.subr.mxu0 0.0
        %647 = vmatpush1.xpose.msra.mxu0 0.0
        %648 = vmatprep.subr.mxu0 0.0
        %649 = vmatpush1.xpose.msra.mxu0 0.0
        %650 = vmatprep.subr.mxu0 0.0
        %651 = vmatpush1.xpose.msra.mxu0 0.0
        %652 = vmatprep.subr.mxu0 0.0
        %653 = vmatpush1.xpose.msra.mxu0 0.0
        %654 = vmatprep.subr.mxu0 0.0
        %655 = vmatpush1.xpose.msra.mxu0 0.0
        %656 = vmatprep.subr.mxu0 0.0
        %657 = vmatpush1.xpose.msra.mxu0 0.0
        %658 = vmatprep.subr.mxu0 0.0
        %659 = vmatpush1.xpose.msra.mxu0 0.0
        %660 = vmatprep.subr.mxu0 0.0
        %661 = vmatpush1.xpose.msra.mxu0 0.0
        %662 = vmatprep.subr.mxu0 0.0
        %663 = vmatpush1.xpose.msra.mxu0 0.0
        %664 = vmatprep.subr.mxu0 0.0
        %665 = vmatpush1.xpose.msra.mxu0 0.0
        %666 = vmatprep.subr.mxu0 0.0
        %667 = vmatpush1.xpose.msra.mxu0 0.0
        %668 = vmatprep.subr.mxu0 0.0
        %669 = vmatpush1.xpose.msra.mxu0 0.0
        %670 = vmatprep.subr.mxu0 0.0
        %671 = vmatpush1.xpose.msra.mxu0 0.0
        %672 = vmatprep.subr.mxu0 0.0
        %673 = vmatpush1.xpose.msra.mxu0 0.0
        %674 = vmatprep.subr.mxu0 0.0
        %675 = vmatpush1.xpose.msra.mxu0 0.0
        %676 = vmatprep.subr.mxu0 0.0
        %677 = vmatpush1.xpose.msra.mxu0 0.0
        %678 = vmatprep.subr.mxu0 0.0
        %679 = vmatpush1.xpose.msra.mxu0 0.0
        %680 = vmatprep.subr.mxu0 0.0
        %681 = vmatpush1.xpose.msra.mxu0 0.0
        %682 = vmatprep.subr.mxu0 0.0
        %683 = vmatpush1.xpose.msra.mxu0 0.0
        %684 = vmatprep.subr.mxu0 0.0
        %685 = vmatpush1.xpose.msra.mxu0 0.0
        %686 = vmatprep.subr.mxu0 0.0
        %687 = vmatpush1.xpose.msra.mxu0 0.0
        %688 = vmatprep.subr.mxu0 0.0
        %689 = vmatpush1.xpose.msra.mxu0 0.0
        %690 = vmatprep.subr.mxu0 0.0
        %691 = vmatpush1.xpose.msra.mxu0 0.0
        %692 = vmatprep.subr.mxu0 0.0
        %693 = vmatpush1.xpose.msra.mxu0 0.0
        %694 = vmatprep.mubr.f32.mxu0 0.0
        %695 = vmatmul.mubr.f32.gmra.mrb[0].mxu0 %v619
        %v696 = vpop.f32.mrb[0].mxu0
        %v697 = vadd.f32 0.0, %v696
        %v698 = vpop.f32.mrb[0].mxu0
        %699 = vmatprep.mubr.f32.mxu0 0.0
        %700 = vmatmul.mubr.f32.gmra.mrb[0].mxu0 %v622
        %v701 = vpop.f32.mrb[0].mxu0
        %v702 = vadd.f32 0.0, %v701
        %v703 = vpop.f32.mrb[0].mxu0
        %704 = vdwg.mxu0
        %v705 = vmul.f32 %v697, 0.125
        %v706 = vmul.f32 %v702, 0.125
        %vm707 = vcmask 130048
        %v708 = vsel %vm707, %v705, -inf
        %709 = vmax.xlane.f32.xlu0 %v708
        %v710 = vpop.xlane.xlu0 %709
        %v711 = vsel %vm707, %v706, -inf
        %712 = vmax.xlane.f32.xlu0 %v711
        %v713 = vpop.xlane.xlu0 %712
        %v714 = vsub.f32 %v705, %v710
        %v715 = vsub.f32 %v706, %v713
        %v716 = vmul.f32 %v714, 1.442695
        %v717 = vpow.pop %v716
        %v718 = vmul.f32 %v715, 1.442695
        %v719 = vpow.pop %v718
        %v720 = vsel %vm707, %v717, 0.0
        %721 = vadd.xlane.f32.xlu0 %v720
        %v722 = vpop.xlane.xlu0 %721
        %v723 = vsel %vm707, %v719, 0.0
        %724 = vadd.xlane.f32.xlu0 %v723
        %v725 = vpop.xlane.xlu0 %724
        %v726 = vrcp.pop %v722
        %v727 = vmul.f32 %v717, %v726
        %v728 = vrcp.pop %v725
        %v729 = vmul.f32 %v719, %v728
        %v731 = vsel %vm707, %v727, 0
        %v734 = vsel %vm707, %v729, 0
        %736 = vmatprep.subr.mxu0 0.0
        %737 = vmatpush1.msra.mxu0 %v609
        %738 = vmatprep.subr.mxu0 0.0
        %739 = vmatpush1.msra.mxu0 %v614
        %740 = vmatprep.subr.mxu0 0.0
        %741 = vmatpush1.msra.mxu0 0.0
        %742 = vmatprep.subr.mxu0 0.0
        %743 = vmatpush1.msra.mxu0 0.0
        %744 = vmatprep.subr.mxu0 0.0
        %745 = vmatpush1.msra.mxu0 0.0
        %746 = vmatprep.subr.mxu0 0.0
        %747 = vmatpush1.msra.mxu0 0.0
        %748 = vmatprep.subr.mxu0 0.0
        %749 = vmatpush1.msra.mxu0 0.0
        %750 = vmatprep.subr.mxu0 0.0
        %751 = vmatpush1.msra.mxu0 0.0
        %752 = vmatprep.subr.mxu0 0.0
        %753 = vmatpush1.msra.mxu0 0.0
        %754 = vmatprep.subr.mxu0 0.0
        %755 = vmatpush1.msra.mxu0 0.0
        %756 = vmatprep.subr.mxu0 0.0
        %757 = vmatpush1.msra.mxu0 0.0
        %758 = vmatprep.subr.mxu0 0.0
        %759 = vmatpush1.msra.mxu0 0.0
        %760 = vmatprep.subr.mxu0 0.0
        %761 = vmatpush1.msra.mxu0 0.0
        %762 = vmatprep.subr.mxu0 0.0
        %763 = vmatpush1.msra.mxu0 0.0
        %764 = vmatprep.subr.mxu0 0.0
        %765 = vmatpush1.msra.mxu0 0.0
        %766 = vmatprep.subr.mxu0 0.0
        %767 = vmatpush1.msra.mxu0 0.0
        %768 = vmatprep.subr.mxu0 0.0
        %769 = vmatpush1.msra.mxu0 0.0
        %770 = vmatprep.subr.mxu0 0.0
        %771 = vmatpush1.msra.mxu0 0.0
        %772 = vmatprep.subr.mxu0 0.0
        %773 = vmatpush1.msra.mxu0 0.0
        %774 = vmatprep.subr.mxu0 0.0
        %775 = vmatpush1.msra.mxu0 0.0
        %776 = vmatprep.subr.mxu0 0.0
        %777 = vmatpush1.msra.mxu0 0.0
        %778 = vmatprep.subr.mxu0 0.0
        %779 = vmatpush1.msra.mxu0 0.0
        %780 = vmatprep.subr.mxu0 0.0
        %781 = vmatpush1.msra.mxu0 0.0
        %782 = vmatprep.subr.mxu0 0.0
        %783 = vmatpush1.msra.mxu0 0.0
        %784 = vmatprep.subr.mxu0 0.0
        %785 = vmatpush1.msra.mxu0 0.0
        %786 = vmatprep.subr.mxu0 0.0
        %787 = vmatpush1.msra.mxu0 0.0
        %788 = vmatprep.subr.mxu0 0.0
        %789 = vmatpush1.msra.mxu0 0.0
        %790 = vmatprep.subr.mxu0 0.0
        %791 = vmatpush1.msra.mxu0 0.0
        %792 = vmatprep.subr.mxu0 0.0
        %793 = vmatpush1.msra.mxu0 0.0
        %794 = vmatprep.subr.mxu0 0.0
        %795 = vmatpush1.msra.mxu0 0.0
        %796 = vmatprep.subr.mxu0 0.0
        %797 = vmatpush1.msra.mxu0 0.0
        %798 = vmatprep.subr.mxu0 0.0
        %799 = vmatpush1.msra.mxu0 0.0
        %800 = vmatprep.mubr.f32.mxu0 0.0
        %801 = vmatmul.mubr.f32.gmra.mrb[0].mxu0 %v731
        %v802 = vpop.f32.mrb[0].mxu0
        %v803 = vadd.f32 0.0, %v802
        %v804 = vpop.f32.mrb[0].mxu0
        %805 = vmatprep.mubr.f32.mxu0 0.0
        %806 = vmatmul.mubr.f32.gmra.mrb[0].mxu0 %v734
        %v807 = vpop.f32.mrb[0].mxu0
        %v808 = vadd.f32 0.0, %v807
        %v809 = vpop.f32.mrb[0].mxu0
        %810 = vdwg.mxu0
        %v811 = vld [vmem:[%s341] sm:$0xff]
        %v812 = vld [vmem:[%s341 + $0x8] sm:$0xff]
        %v813 = vld [vmem:[%s341 + $0x10] sm:$0xff]
        %v814 = vld [vmem:[%s341 + $0x18] sm:$0xff]
        %v815 = vld [vmem:[%s341 + $0x20] sm:$0xff]
        %v816 = vld [vmem:[%s341 + $0x28] sm:$0xff]
        %v817 = vld [vmem:[%s341 + $0x30] sm:$0xff]
        %v818 = vld [vmem:[%s341 + $0x38] sm:$0xff]
        %v820 = vsel %vm617, %v803, 0
        %v823 = vsel %vm617, %v808, 0
        %825 = vmatprep.subr.mxu0 0.0
        %826 = vmatpush1.msra.mxu0 %v811
        %827 = vmatprep.subr.mxu0 0.0
        %828 = vmatpush1.msra.mxu0 %v812
        %829 = vmatprep.subr.mxu0 0.0
        %830 = vmatpush1.msra.mxu0 %v813
        %831 = vmatprep.subr.mxu0 0.0
        %832 = vmatpush1.msra.mxu0 %v814
        %833 = vmatprep.subr.mxu0 0.0
        %834 = vmatpush1.msra.mxu0 %v815
        %835 = vmatprep.subr.mxu0 0.0
        %836 = vmatpush1.msra.mxu0 %v816
        %837 = vmatprep.subr.mxu0 0.0
        %838 = vmatpush1.msra.mxu0 %v817
        %839 = vmatprep.subr.mxu0 0.0
        %840 = vmatpush1.msra.mxu0 %v818
        %841 = vmatprep.subr.mxu0 0.0
        %842 = vmatpush1.msra.mxu0 0.0
        %843 = vmatprep.subr.mxu0 0.0
        %844 = vmatpush1.msra.mxu0 0.0
        %845 = vmatprep.subr.mxu0 0.0
        %846 = vmatpush1.msra.mxu0 0.0
        %847 = vmatprep.subr.mxu0 0.0
        %848 = vmatpush1.msra.mxu0 0.0
        %849 = vmatprep.subr.mxu0 0.0
        %850 = vmatpush1.msra.mxu0 0.0
        %851 = vmatprep.subr.mxu0 0.0
        %852 = vmatpush1.msra.mxu0 0.0
        %853 = vmatprep.subr.mxu0 0.0
        %854 = vmatpush1.msra.mxu0 0.0
        %855 = vmatprep.subr.mxu0 0.0
        %856 = vmatpush1.msra.mxu0 0.0
        %857 = vmatprep.subr.mxu0 0.0
        %858 = vmatpush1.msra.mxu0 0.0
        %859 = vmatprep.subr.mxu0 0.0
        %860 = vmatpush1.msra.mxu0 0.0
        %861 = vmatprep.subr.mxu0 0.0
        %862 = vmatpush1.msra.mxu0 0.0
        %863 = vmatprep.subr.mxu0 0.0
        %864 = vmatpush1.msra.mxu0 0.0
        %865 = vmatprep.subr.mxu0 0.0
        %866 = vmatpush1.msra.mxu0 0.0
        %867 = vmatprep.subr.mxu0 0.0
        %868 = vmatpush1.msra.mxu0 0.0
        %869 = vmatprep.subr.mxu0 0.0
        %870 = vmatpush1.msra.mxu0 0.0
        %871 = vmatprep.subr.mxu0 0.0
        %872 = vmatpush1.msra.mxu0 0.0
        %873 = vmatprep.subr.mxu0 0.0
        %874 = vmatpush1.msra.mxu0 0.0
        %875 = vmatprep.subr.mxu0 0.0
        %876 = vmatpush1.msra.mxu0 0.0
        %877 = vmatprep.subr.mxu0 0.0
        %878 = vmatpush1.msra.mxu0 0.0
        %879 = vmatprep.subr.mxu0 0.0
        %880 = vmatpush1.msra.mxu0 0.0
        %881 = vmatprep.subr.mxu0 0.0
        %882 = vmatpush1.msra.mxu0 0.0
        %883 = vmatprep.subr.mxu0 0.0
        %884 = vmatpush1.msra.mxu0 0.0
        %885 = vmatprep.subr.mxu0 0.0
        %886 = vmatpush1.msra.mxu0 0.0
        %887 = vmatprep.subr.mxu0 0.0
        %888 = vmatpush1.msra.mxu0 0.0
        %889 = vmatprep.mubr.f32.mxu0 0.0
        %890 = vmatmul.mubr.f32.gmra.mrb[0].mxu0 %v820
        %v891 = vpop.f32.mrb[0].mxu0
        %v892 = vadd.f32 0.0, %v891
        %v893 = vpop.f32.mrb[0].mxu0
        %894 = vmatprep.mubr.f32.mxu0 0.0
        %895 = vmatmul.mubr.f32.gmra.mrb[0].mxu0 %v823
        %v896 = vpop.f32.mrb[0].mxu0
        %v897 = vadd.f32 0.0, %v896
        %v898 = vpop.f32.mrb[0].mxu0
        %899 = vdwg.mxu0
        %p900 = scmp.eq.s32.totalorder %s25, 0
        // Predicated region
        $region45: #{tpu_custom_call.1} parent=43 // pred_check
          %p901 = pneg %p900
        $region46: #{tpu_custom_call.1} parent=43 // pred_check_branch
          %903 = sbr.rel (%p901) target = $region48
        $region47: #{tpu_custom_call.1} parent=43 // pred_region
          %v904 = vld [vmem:[%s5] sm:$0x1]
          %v906 = vlaneseq
          %v907 = vshrl.u32 %v906, 7
          %v908 = vsub.s32 0, %v907
          %v909 = vrot.slane %v904, %v908
          %911 = vst [vmem:[%s316] sm:$0xff] %v909
          %912 = vst [vmem:[%s316 + $0x8] sm:$0xff] %v909
        $region48: #{tpu_custom_call.1} parent=43 // pred_fallthru
          _
        %v913 = vld [vmem:[%s316] sm:$0xff]
        %v914 = vld [vmem:[%s316 + $0x8] sm:$0xff]
        %v915 = vadd.f32 %v913, %v892
        %v916 = vadd.f32 %v914, %v897
        %917 = vst [vmem:[%s316] sm:$0xff] %v915
        %918 = vst [vmem:[%s316 + $0x8] sm:$0xff] %v916
        %s919 = sand.u32 %s191, 1
        %s920 = scalar_lea.sflag [#allocation3], %s919
        %s921 = sand.u32 %s191, 1
        %s922 = smul.addr %s921, 16
        %s923 = scalar_lea.vmem [#allocation2], %s922
        // Predicated region
        $region49: #{tpu_custom_call.1} parent=43 // pred_check
          %p924 = pneg %p201
        $region50: #{tpu_custom_call.1} parent=43 // pred_check_branch
          %926 = sbr.rel (%p924) target = $region52
        $region51: #{tpu_custom_call.1} parent=43 // pred_region
          %s928 = ssub.s32 256, 256
          %929 = vsyncadd %s920, %s928
          %s930 = smul.addr %s24, 2
          %s931 = smul.addr %s930, 128
          %s932 = scalar_lea.hbm %s6, %s931
          %s933 = sshll.u32 %s923, 4
          %s934 = int_to_ptr.vmem [resolvable:$true] %s933
          %939 = dma.vmem_to_hbm [thread:$0]  %s934, 256, %s932, %s920, 128, 128, 8
        $region52: #{tpu_custom_call.1} parent=43 // pred_fallthru
          _
      $region44: #{tpu_custom_call.1} parent=5 // pred_fallthru
        _
      %p940 = scmp.le.s32.totalorder 2, %s15
      // Predicated region
      $region53: #{tpu_custom_call.1} parent=5 // pred_check
        %p941 = pneg %p940
      $region54: #{tpu_custom_call.1} parent=5 // pred_check_branch
        %943 = sbr.rel (%p941) target = $region56
      $region55: #{tpu_custom_call.1} parent=5 // pred_region
        %s944 = ssub.s32 %s15, 2
        // Predicated region
        $region57: #{tpu_custom_call.1} parent=55 // pred_check
          %p945 = pneg %p207
        $region58: #{tpu_custom_call.1} parent=55 // pred_check_branch
          %947 = sbr.rel (%p945) target = $region60
        $region59: #{tpu_custom_call.1} parent=55 // pred_region
          %s948 = sand.u32 %s192, 1
          %s949 = scalar_lea.sflag [#allocation3], %s948
          %s950 = sand.u32 %s192, 1
          %s951 = smul.addr %s950, 16
          %s952 = scalar_lea.vmem [#allocation2], %s951
          %953 = dma.done %s949, 256
        $region60: #{tpu_custom_call.1} parent=55 // pred_fallthru
          _
      $region56: #{tpu_custom_call.1} parent=5 // pred_fallthru
        _
    $region6: #{tpu_custom_call.1} parent=1 // loop_footer
      %s19 = sadd.s32 1, %s15
    $region7: #{tpu_custom_call.1} parent=1 // loop_footer_branch
      %14 = sbr.rel target = $region3
    $region8: #{tpu_custom_call.1} parent=1 // loop_exit
      _
    %954 = vsyncpa [#allocation3], 1
    %s955 = scalar_lea.sflag [#allocation3], 1
    %956 = vsyncpa %s955, 1

</llo_original>
